<compile_context>
chip_gen: v7x
topology: tpu7x:2x2x1
jax: 0.10.0
libtpu: 0.0.40
codegen_flags: <defaults>
</compile_context>

<pallas_src>
import jax
import jax.numpy as jnp
import numpy as np
from jax import lax
from jax.experimental import pallas as pl
from jax.experimental.pallas import tpu as pltpu

BN_EPS = 1e-5


def noise_layer_kernel(x_ref, p_ref, o_ref):
    # x_ref: (N, Cin, HW)   -- HW (multiple of 128) on lanes, channels on sublanes
    # p_ref: (max(Cin,Cout), Cin+3+N) packed params (one vreg after padding):
    #          cols [0:Cin]          conv 1x1 weight        (rows [0:Cout])
    #          col  [Cin]            conv bias              (rows [0:Cout])
    #          col  [Cin+1]          bn gamma               (rows [0:Cin])
    #          col  [Cin+2]          bn beta                (rows [0:Cin])
    #          cols [Cin+3:Cin+3+N]  per-image per-channel noise (rows [0:Cin])
    # o_ref: (N, Cout, HW)  -- lane-dense output
    n_batch, cin, hw = x_ref.shape
    cout = o_ref.shape[1]
    inv_count = 1.0 / float(n_batch * hw)

    p = p_ref[...]
    w = p[:cout, :cin]                    # (Cout, Cin)
    bias = p[:cout, cin:cin + 1]          # (Cout, 1)
    gamma = p[:cin, cin + 1:cin + 2]      # (Cin, 1)
    beta = p[:cin, cin + 2:cin + 3]       # (Cin, 1)

    # --- noise add + ReLU per image; concatenate images along the lane axis so
    #     the stats + conv below run as one batched pass / one MXU push. ---
    r_list = []
    for n in range(n_batch):              # N=2, unrolled
        noise_n = p[:cin, cin + 3 + n:cin + 4 + n]                 # (Cin, 1)
        r_list.append(jnp.maximum(x_ref[n] + noise_n, 0.0))        # (Cin, HW)
    r = r_list[0] if n_batch == 1 else jnp.concatenate(r_list, axis=-1)  # (Cin, N*HW)

    # --- two-pass BN batch stats per channel (numerically robust) ---
    mean = jnp.sum(r, axis=1, keepdims=True) * inv_count           # (Cin, 1)
    centered = r - mean                                            # reused below
    var = jnp.sum(centered * centered, axis=1, keepdims=True) * inv_count
    scale = gamma * lax.rsqrt(var + BN_EPS)                        # (Cin, 1)

    # --- BN normalize + affine: single fused scale+shift pass over the slab.
    #     (Full weight-side fold would need a (Cin,1)->(1,Cin) relayout of
    #      `scale` + an extra MXU micro-push for the bias; not worth it at K=4.)
    a = centered * scale + beta                                    # (Cin, N*HW)

    # --- 1x1 conv: ONE batched MXU push for both images ---
    z = jnp.dot(w, a, preferred_element_type=jnp.float32) + bias   # (Cout, N*HW)

    # --- split the lane-concatenated result back into per-image tiles ---
    for n in range(n_batch):
        o_ref[n] = z[:, n * hw:(n + 1) * hw].astype(o_ref.dtype)


def noise_layer_forward(x_nchw, noise, conv_w, conv_b, bn_gamma, bn_beta):
    """x_nchw: (N, Cin, H, W) float32; returns (N, Cout, H, W)."""
    N, Cin, H, W = x_nchw.shape
    Cout = conv_w.shape[0]
    HW = H * W

    # ---- PyTorch forward's noise batch-size fixup (glue, exact semantics) ----
    if N != noise.shape[0]:
        if N < noise.shape[0]:
            noise = noise[:N]
        else:
            # expand_noise[:, :, :, :] = self.noise[0, 0, 0, 0]
            noise = jnp.full((N, Cin, 1, 1), noise[0, 0, 0, 0], dtype=noise.dtype)
    # TODO(synk): the `noise.numel() == 0` in-place resize_().uniform_() branch is
    # unreachable here (noise always has Cin elements) and is not implemented.

    # ---- pack every tiny per-channel parameter into ONE small operand ----
    # (in a real model this is built once at init; only the noise columns change
    #  when the fixup triggers)  -> kernel issues 2 DMAs instead of 6.
    P = max(Cin, Cout)
    params = jnp.zeros((P, Cin + 3 + N), jnp.float32)
    params = params.at[:Cout, :Cin].set(conv_w.reshape(Cout, Cin).astype(jnp.float32))
    params = params.at[:Cout, Cin].set(conv_b.astype(jnp.float32))
    params = params.at[:Cin, Cin + 1].set(bn_gamma.astype(jnp.float32))
    params = params.at[:Cin, Cin + 2].set(bn_beta.astype(jnp.float32))
    params = params.at[:Cin, Cin + 3:].set(noise.reshape(N, Cin).T.astype(jnp.float32))

    # ---- layout glue: pure reshape only (no transposes / HBM relayout) ----
    x3 = x_nchw.reshape(N, Cin, HW)

    # Whole problem is ~24 KiB, so a single VMEM-resident block (no grid) is the
    # right shape; per-call overhead dominates and tiling would only add steps.
    # TODO(synk): for large H*W, grid over HW with block (N, Cin, hw_tile),
    # hw_tile a multiple of 512 lanes, accumulate sum/sum-sq in VMEM scratch
    # across an "arbitrary" HW axis (two-pass BN becomes a two-kernel or
    # carry-style pipeline); size tiles so double-buffered input + output blocks
    # stay under ~16 MiB on v7x (32 MiB default scoped VMEM of 64 MiB physical),
    # ~2x larger on v5e/v6e with CompilerParams(vmem_limit_bytes=...); mark the
    # independent grid axis "parallel" in dimension_semantics so v7x shards it
    # across its 2 TensorCores.
    out3 = pl.pallas_call(
        noise_layer_kernel,
        out_shape=jax.ShapeDtypeStruct((N, Cout, HW), jnp.float32),
        in_specs=[pl.BlockSpec(memory_space=pltpu.MemorySpace.VMEM),
                  pl.BlockSpec(memory_space=pltpu.MemorySpace.VMEM)],
        out_specs=pl.BlockSpec(memory_space=pltpu.MemorySpace.VMEM),
    )(x3, params)

    # ---- free reshape back to NCHW ----
    return out3.reshape(N, Cout, H, W)


def _reference(x_nchw, noise, conv_w, conv_b, bn_gamma, bn_beta):
    """Pure-JAX reference mirroring the PyTorch module (training-mode BN)."""
    N, Cin, H, W = x_nchw.shape
    if N != noise.shape[0]:
        if N < noise.shape[0]:
            noise = noise[:N]
        else:
            noise = jnp.full((N, Cin, 1, 1), noise[0, 0, 0, 0], dtype=noise.dtype)
    y = x_nchw + noise
    y = jnp.maximum(y, 0.0)
    mean = jnp.mean(y, axis=(0, 2, 3), keepdims=True)
    var = jnp.mean((y - mean) ** 2, axis=(0, 2, 3), keepdims=True)
    y = (y - mean) / jnp.sqrt(var + BN_EPS)
    y = y * bn_gamma.reshape(1, -1, 1, 1) + bn_beta.reshape(1, -1, 1, 1)
    z = jnp.einsum("nchw,oc->nohw", y, conv_w.reshape(conv_w.shape[0], Cin))
    return z + conv_b.reshape(1, -1, 1, 1)


if __name__ == "__main__":
    in_planes, out_planes, level = 4, 8, 0.1  # level unused (numel() > 0 branch)
    N, H, W = 2, 16, 16

    key = jax.random.PRNGKey(0)
    k_x, k_noise, k_w, k_b = jax.random.split(key, 4)

    x = jax.random.normal(k_x, (N, in_planes, H, W), dtype=jnp.float32)

    # module params (deterministic in-script init, PyTorch-equivalent shapes)
    noise = jax.random.normal(k_noise, (1, in_planes, 1, 1), dtype=jnp.float32)
    conv_w = jax.random.normal(k_w, (out_planes, in_planes, 1, 1), jnp.float32) * 0.1
    conv_b = jax.random.normal(k_b, (out_planes,), jnp.float32) * 0.1
    bn_gamma = jnp.ones((in_planes,), jnp.float32)   # BatchNorm2d default init
    bn_beta = jnp.zeros((in_planes,), jnp.float32)

    out = noise_layer_forward(x, noise, conv_w, conv_b, bn_gamma, bn_beta)
    out = jax.block_until_ready(out)

    ref = _reference(x, noise, conv_w, conv_b, bn_gamma, bn_beta)
    np.testing.assert_allclose(np.asarray(out), np.asarray(ref), rtol=1e-4, atol=1e-4)
    assert out.shape == (N, out_planes, H, W)

    print("KERNEL_OK")
</pallas_src>

<mosaic_0001>
module attributes {stable_mosaic.version = 11 : i64} {
  func.func @noise_layer_kernel(%arg0: memref<2x4x256xf32, #tpu.memory_space<vmem>>, %arg1: memref<8x9xf32, #tpu.memory_space<vmem>>, %arg2: memref<2x8x256xf32, #tpu.memory_space<vmem>>) attributes {dimension_semantics = [], scalar_prefetch = 0 : i64, scratch_operands = 0 : i64, tpu.core_type = #tpu.core_type<tc>} {
    %c0 = arith.constant 0 : index
    %c0_0 = arith.constant 0 : index
    %0 = vector.load %arg1[%c0, %c0_0] : memref<8x9xf32, #tpu.memory_space<vmem>>, vector<8x9xf32>
    %1 = vector.extract_strided_slice %0 {offsets = [0, 0], sizes = [8, 4], strides = [1, 1]} : vector<8x9xf32> to vector<8x4xf32>
    %2 = vector.extract_strided_slice %0 {offsets = [0, 4], sizes = [8, 1], strides = [1, 1]} : vector<8x9xf32> to vector<8x1xf32>
    %3 = vector.extract_strided_slice %0 {offsets = [0, 5], sizes = [4, 1], strides = [1, 1]} : vector<8x9xf32> to vector<4x1xf32>
    %4 = vector.extract_strided_slice %0 {offsets = [0, 6], sizes = [4, 1], strides = [1, 1]} : vector<8x9xf32> to vector<4x1xf32>
    %5 = vector.extract_strided_slice %0 {offsets = [0, 7], sizes = [4, 1], strides = [1, 1]} : vector<8x9xf32> to vector<4x1xf32>
    %c0_1 = arith.constant 0 : index
    %c0_2 = arith.constant 0 : index
    %c0_3 = arith.constant 0 : index
    %6 = vector.load %arg0[%c0_1, %c0_2, %c0_3] : memref<2x4x256xf32, #tpu.memory_space<vmem>>, vector<1x4x256xf32>
    %7 = vector.shape_cast %6 : vector<1x4x256xf32> to vector<4x256xf32>
    %8 = vector.broadcast %5 : vector<4x1xf32> to vector<4x256xf32>
    %9 = arith.addf %7, %8 : vector<4x256xf32>
    %cst = arith.constant 0.000000e+00 : f32
    %10 = vector.broadcast %cst : f32 to vector<4x256xf32>
    %11 = arith.maximumf %9, %10 : vector<4x256xf32>
    %12 = vector.extract_strided_slice %0 {offsets = [0, 8], sizes = [4, 1], strides = [1, 1]} : vector<8x9xf32> to vector<4x1xf32>
    %c1 = arith.constant 1 : index
    %c0_4 = arith.constant 0 : index
    %c0_5 = arith.constant 0 : index
    %13 = vector.load %arg0[%c1, %c0_4, %c0_5] : memref<2x4x256xf32, #tpu.memory_space<vmem>>, vector<1x4x256xf32>
    %14 = vector.shape_cast %13 : vector<1x4x256xf32> to vector<4x256xf32>
    %15 = vector.broadcast %12 : vector<4x1xf32> to vector<4x256xf32>
    %16 = arith.addf %14, %15 : vector<4x256xf32>
    %cst_6 = arith.constant 0.000000e+00 : f32
    %17 = vector.broadcast %cst_6 : f32 to vector<4x256xf32>
    %18 = arith.maximumf %16, %17 : vector<4x256xf32>
    %19 = tpu.concatenate %11, %18 in 1 : vector<4x256xf32>, vector<4x256xf32> -> vector<4x512xf32>
    %cst_7 = arith.constant dense<0.000000e+00> : vector<4xf32>
    %20 = vector.multi_reduction <add>, %19, %cst_7 [1] : vector<4x512xf32> to vector<4xf32>
    %21 = vector.shape_cast %20 : vector<4xf32> to vector<4x1xf32>
    %cst_8 = arith.constant 0.001953125 : f32
    %22 = vector.broadcast %cst_8 : f32 to vector<4x1xf32>
    %23 = arith.mulf %21, %22 : vector<4x1xf32>
    %24 = vector.broadcast %23 : vector<4x1xf32> to vector<4x512xf32>
    %25 = arith.subf %19, %24 : vector<4x512xf32>
    %26 = arith.mulf %25, %25 : vector<4x512xf32>
    %cst_9 = arith.constant dense<0.000000e+00> : vector<4xf32>
    %27 = vector.multi_reduction <add>, %26, %cst_9 [1] : vector<4x512xf32> to vector<4xf32>
    %28 = vector.shape_cast %27 : vector<4xf32> to vector<4x1xf32>
    %cst_10 = arith.constant 0.001953125 : f32
    %29 = vector.broadcast %cst_10 : f32 to vector<4x1xf32>
    %30 = arith.mulf %28, %29 : vector<4x1xf32>
    %cst_11 = arith.constant 9.99999974E-6 : f32
    %31 = vector.broadcast %cst_11 : f32 to vector<4x1xf32>
    %32 = arith.addf %30, %31 : vector<4x1xf32>
    %33 = math.rsqrt %32 : vector<4x1xf32>
    %34 = arith.mulf %3, %33 : vector<4x1xf32>
    %35 = vector.broadcast %34 : vector<4x1xf32> to vector<4x512xf32>
    %36 = arith.mulf %25, %35 : vector<4x512xf32>
    %37 = vector.broadcast %4 : vector<4x1xf32> to vector<4x512xf32>
    %38 = arith.addf %36, %37 : vector<4x512xf32>
    %cst_12 = arith.constant dense<0.000000e+00> : vector<8x512xf32>
    %39 = tpu.matmul %1, %38, %cst_12 {dimension_numbers = #tpu.dot_dimension_numbers<[1], [0], [0], [1], [0, 0, 1, 1], [], []>} : vector<8x4xf32>, vector<4x512xf32>, vector<8x512xf32> -> vector<8x512xf32>
    %40 = vector.broadcast %2 : vector<8x1xf32> to vector<8x512xf32>
    %41 = arith.addf %39, %40 : vector<8x512xf32>
    %42 = vector.extract_strided_slice %41 {offsets = [0, 0], sizes = [8, 256], strides = [1, 1]} : vector<8x512xf32> to vector<8x256xf32>
    %c0_13 = arith.constant 0 : index
    %c0_14 = arith.constant 0 : index
    %c0_15 = arith.constant 0 : index
    %43 = vector.load %arg2[%c0_13, %c0_14, %c0_15] : memref<2x8x256xf32, #tpu.memory_space<vmem>>, vector<1x8x256xf32>
    %44 = vector.shape_cast %43 : vector<1x8x256xf32> to vector<8x256xf32>
    %45 = vector.shape_cast %42 : vector<8x256xf32> to vector<1x8x256xf32>
    tpu.vector_store %arg2[%c0_13, %c0_14, %c0_15], %45 {strides = array<i32>} : memref<2x8x256xf32, #tpu.memory_space<vmem>>, vector<1x8x256xf32>,
    %46 = vector.extract_strided_slice %41 {offsets = [0, 256], sizes = [8, 256], strides = [1, 1]} : vector<8x512xf32> to vector<8x256xf32>
    %c1_16 = arith.constant 1 : index
    %c0_17 = arith.constant 0 : index
    %c0_18 = arith.constant 0 : index
    %47 = vector.load %arg2[%c1_16, %c0_17, %c0_18] : memref<2x8x256xf32, #tpu.memory_space<vmem>>, vector<1x8x256xf32>
    %48 = vector.shape_cast %47 : vector<1x8x256xf32> to vector<8x256xf32>
    %49 = vector.shape_cast %46 : vector<8x256xf32> to vector<1x8x256xf32>
    tpu.vector_store %arg2[%c1_16, %c0_17, %c0_18], %49 {strides = array<i32>} : memref<2x8x256xf32, #tpu.memory_space<vmem>>, vector<1x8x256xf32>,
    return
  }
}

</mosaic_0001>

<llo_original>
// kernel: tpu_custom_call.1
$region0: #{tpu_custom_call.1}
  #allocation0 [shape = 'u32[]', space=smem, size = 0x4, offset = 0x4, fixed_abs, tag = 'smem constant byte address 0x4 - core index']
  #allocation1 [shape = 'u32[144,128]{1,0:T(1,128)}', space=vmem, size = 0x12000, scoped, tag = 'internal scratch']
  %s0 = inlined_call_operand.hbm [shape: f32[2,4,256], index: 0, kind: input, shape index: {}]
  %s1 = inlined_call_operand.hbm [shape: f32[8,9], index: 1, kind: input, shape index: {}]
  %s2 = inlined_call_operand.hbm [shape: f32[2,8,256], index: 2, kind: output, shape index: {}]
  %s3 = sld [smem:[#allocation0]]
  $region26: #{tpu_custom_call.1} parent=0
    _
  %s5 = ssub.s32 1, %s3
  %s6 = scalar_select 0, %s5, %s3
  $region1: #{tpu_custom_call.1} parent=0
    #allocation2 [shape = 'u8[8192]{0}', space=vmem, size = 0x2000, scoped, tag = 'input window, operand 0, single buffered']
    #allocation3 [shape = 's32[1]{0}', space=sflag, size = 0x4, scoped, tag = 'scoped memory for tpu_custom_call.1']
    #allocation4 [shape = 's32[1]{0}', space=sflag, size = 0x4, scoped, tag = 'scoped memory for tpu_custom_call.1']
    #allocation5 [shape = 'u8[4096]{0}', space=vmem, size = 0x1000, scoped, tag = 'input window, operand 1, single buffered']
    #allocation6 [shape = 's32[1]{0}', space=sflag, size = 0x4, scoped, tag = 'scoped memory for tpu_custom_call.1']
    #allocation7 [shape = 'u8[16384]{0}', space=vmem, size = 0x4000, scoped, tag = 'output window, operand 0, single buffered']
    %7 = vsyncpa [#allocation3], 0
    %8 = vsyncpa [#allocation6], 0
    %9 = vsyncpa [#allocation4], 0
    // Predicated region
    $region2: #{tpu_custom_call.1} parent=1 // pred_check
      _
    $region3: #{tpu_custom_call.1} parent=1 // pred_check_branch
      %11 = sbr.rel (0) target = $region5
    $region4: #{tpu_custom_call.1} parent=1 // pred_region
      %s13 = ssub.s32 256, 256
      %14 = vsyncadd [#allocation3], %s13
      %s15 = sshll.u32 [#allocation2], 4
      %s16 = int_to_ptr.vmem [resolvable:$true] %s15
      %21 = dma.hbm_to_vmem [thread:$0]  %s0, 256, %s16, [#allocation3], 128, 128, 8
    $region5: #{tpu_custom_call.1} parent=1 // pred_fallthru
      _
    // Predicated region
    $region6: #{tpu_custom_call.1} parent=1 // pred_check
      _
    $region7: #{tpu_custom_call.1} parent=1 // pred_check_branch
      %23 = sbr.rel (0) target = $region9
    $region8: #{tpu_custom_call.1} parent=1 // pred_region
      %s25 = ssub.s32 128, 128
      %26 = vsyncadd [#allocation6], %s25
      %s28 = sshll.u32 [#allocation5], 4
      %s29 = int_to_ptr.vmem [resolvable:$true] %s28
      %31 = dma.hbm_to_vmem [thread:$0]  %s1, 128, %s29, [#allocation6]
    $region9: #{tpu_custom_call.1} parent=1 // pred_fallthru
      _
    // Predicated region
    $region10: #{tpu_custom_call.1} parent=1 // pred_check
      _
    $region11: #{tpu_custom_call.1} parent=1 // pred_check_branch
      %33 = sbr.rel (0) target = $region13
    $region12: #{tpu_custom_call.1} parent=1 // pred_region
      %34 = dma.done [#allocation3], 256
    $region13: #{tpu_custom_call.1} parent=1 // pred_fallthru
      _
    // Predicated region
    $region14: #{tpu_custom_call.1} parent=1 // pred_check
      _
    $region15: #{tpu_custom_call.1} parent=1 // pred_check_branch
      %36 = sbr.rel (0) target = $region17
    $region16: #{tpu_custom_call.1} parent=1 // pred_region
      %37 = dma.done [#allocation6], 128
    $region17: #{tpu_custom_call.1} parent=1 // pred_fallthru
      _
    %v38 = vld [vmem:[#allocation5] sm:$0xff]
    %v39 = vld [vmem:[#allocation2] sm:$0xff]
    %41 = vset.pattern.permute.xlu0 7
    %42 = vperm.xlu0 %41, %v38
    %v43 = vpop.permute.xlu0 %42
    %v45 = vunpack.c.l.s4 839922192
    %v46 = vunpack.c.0.s8 %v45
    %v47 = vlaneseq
    %v48 = vshrl.u32 %v47, 7
    %v49 = vsub.s32 %v46, %v48
    %v50 = vrot.slane %v43, %v49
    %v52 = vadd.f32 %v39, %v50
    %v53 = vmax.f32 %v52, 0.0
    %s54 = scalar_lea.vmem [#allocation2], 8
    %v55 = vld [vmem:[%s54] sm:$0xff]
    %56 = vset.pattern.permute.xlu0 8
    %57 = vperm.xlu0 %56, %v38
    %v58 = vpop.permute.xlu0 %57
    %v60 = vunpack.c.l.s4 839922192
    %v61 = vunpack.c.0.s8 %v60
    %v62 = vlaneseq
    %v63 = vshrl.u32 %v62, 7
    %v64 = vsub.s32 %v61, %v63
    %v65 = vrot.slane %v58, %v64
    %v67 = vadd.f32 %v55, %v65
    %v68 = vmax.f32 %v67, 0.0
    %v70 = vcombine.high %v53, %v53
    %v73 = vcombine.high %v68, %v68
    %vm75 = vcmask 1043456
    %v76 = vsel %vm75, %v53, 0.0
    %v77 = vsel %vm75, %v70, 0.0
    %v78 = vadd.f32 %v76, %v77
    %v79 = vsel %vm75, %v68, 0.0
    %v80 = vadd.f32 %v78, %v79
    %v81 = vsel %vm75, %v73, 0.0
    %v82 = vadd.f32 %v80, %v81
    %83 = vadd.xlane.f32.xlu0 %v82
    %v84 = vpop.xlane.xlu0 %83
    %v85 = vmul.f32 %v84, 0.001953125
    %v86 = vsub.f32 %v53, %v85
    %v87 = vsub.f32 %v70, %v85
    %v88 = vsub.f32 %v68, %v85
    %v89 = vsub.f32 %v73, %v85
    %v90 = vmul.f32 %v86, %v86
    %v91 = vmul.f32 %v87, %v87
    %v92 = vmul.f32 %v88, %v88
    %v93 = vmul.f32 %v89, %v89
    %v94 = vsel %vm75, %v90, 0.0
    %v95 = vsel %vm75, %v91, 0.0
    %v96 = vadd.f32 %v94, %v95
    %v97 = vsel %vm75, %v92, 0.0
    %v98 = vadd.f32 %v96, %v97
    %v99 = vsel %vm75, %v93, 0.0
    %v100 = vadd.f32 %v98, %v99
    %101 = vadd.xlane.f32.xlu0 %v100
    %v102 = vpop.xlane.xlu0 %101
    %v103 = vmul.f32 %v102, 0.001953125
    %v104 = vadd.f32 %v103, 1e-05
    %v105 = vrsqrt.pop %v104
    %v106 = vmul.f32 %v38, %v105
    %108 = vset.pattern.permute.xlu0 5
    %109 = vperm.xlu0 %108, %v106
    %v110 = vpop.permute.xlu0 %109
    %v112 = vmul.f32 %v86, %v110
    %v113 = vmul.f32 %v87, %v110
    %v114 = vmul.f32 %v88, %v110
    %v115 = vmul.f32 %v89, %v110
    %116 = vset.pattern.permute.xlu0 6
    %117 = vperm.xlu0 %116, %v38
    %v118 = vpop.permute.xlu0 %117
    %v120 = vadd.f32 %v112, %v118
    %v121 = vadd.f32 %v113, %v118
    %v122 = vadd.f32 %v114, %v118
    %v123 = vadd.f32 %v115, %v118
    %124 = vset.pattern.permute.xlu0 4
    %125 = vperm.xlu0 %124, %v38
    %v126 = vpop.permute.xlu0 %125
    %vm128 = vcmask 31744
    %v129 = vsel %vm128, %v38, 0
    %v132 = vsel %vm75, %v120, 0
    %v135 = vsel %vm75, %v121, 0
    %v138 = vsel %vm75, %v122, 0
    %v141 = vsel %vm75, %v123, 0
    %143 = vmatprep.subr.mxu0 %v135
    %144 = vmatpush1.msra.mxu0 %v132
    %145 = vmatprep.subr.mxu0 0.0
    %146 = vmatpush1.msra.mxu0 0.0
    %147 = vmatprep.subr.mxu0 0.0
    %148 = vmatpush1.msra.mxu0 0.0
    %149 = vmatprep.subr.mxu0 0.0
    %150 = vmatpush1.msra.mxu0 0.0
    %151 = vmatprep.subr.mxu0 0.0
    %152 = vmatpush1.msra.mxu0 0.0
    %153 = vmatprep.subr.mxu0 0.0
    %154 = vmatpush1.msra.mxu0 0.0
    %155 = vmatprep.subr.mxu0 0.0
    %156 = vmatpush1.msra.mxu0 0.0
    %157 = vmatprep.subr.mxu0 0.0
    %158 = vmatpush1.msra.mxu0 0.0
    %159 = vmatprep.subr.mxu0 0.0
    %160 = vmatpush1.msra.mxu0 0.0
    %161 = vmatprep.subr.mxu0 0.0
    %162 = vmatpush1.msra.mxu0 0.0
    %163 = vmatprep.subr.mxu0 0.0
    %164 = vmatpush1.msra.mxu0 0.0
    %165 = vmatprep.subr.mxu0 0.0
    %166 = vmatpush1.msra.mxu0 0.0
    %167 = vmatprep.subr.mxu0 0.0
    %168 = vmatpush1.msra.mxu0 0.0
    %169 = vmatprep.subr.mxu0 0.0
    %170 = vmatpush1.msra.mxu0 0.0
    %171 = vmatprep.subr.mxu0 0.0
    %172 = vmatpush1.msra.mxu0 0.0
    %173 = vmatprep.subr.mxu0 0.0
    %174 = vmatpush1.msra.mxu0 0.0
    %175 = vmatprep.subr.mxu0 0.0
    %176 = vmatpush1.msra.mxu0 0.0
    %177 = vmatprep.subr.mxu0 0.0
    %178 = vmatpush1.msra.mxu0 0.0
    %179 = vmatprep.subr.mxu0 0.0
    %180 = vmatpush1.msra.mxu0 0.0
    %181 = vmatprep.subr.mxu0 0.0
    %182 = vmatpush1.msra.mxu0 0.0
    %183 = vmatprep.subr.mxu0 0.0
    %184 = vmatpush1.msra.mxu0 0.0
    %185 = vmatprep.subr.mxu0 0.0
    %186 = vmatpush1.msra.mxu0 0.0
    %187 = vmatprep.subr.mxu0 0.0
    %188 = vmatpush1.msra.mxu0 0.0
    %189 = vmatprep.subr.mxu0 0.0
    %190 = vmatpush1.msra.mxu0 0.0
    %191 = vmatprep.subr.mxu0 0.0
    %192 = vmatpush1.msra.mxu0 0.0
    %193 = vmatprep.subr.mxu0 0.0
    %194 = vmatpush1.msra.mxu0 0.0
    %195 = vmatprep.subr.mxu0 0.0
    %196 = vmatpush1.msra.mxu0 0.0
    %197 = vmatprep.subr.mxu0 0.0
    %198 = vmatpush1.msra.mxu0 0.0
    %199 = vmatprep.subr.mxu0 0.0
    %200 = vmatpush1.msra.mxu0 0.0
    %201 = vmatprep.subr.mxu0 0.0
    %202 = vmatpush1.msra.mxu0 0.0
    %203 = vmatprep.subr.mxu0 0.0
    %204 = vmatpush1.msra.mxu0 0.0
    %205 = vmatprep.subr.mxu0 0.0
    %206 = vmatpush1.msra.mxu0 0.0
    %207 = vmatprep.mubr.f32.mxu0 0.0
    %208 = vmatmul.mubr.f32.gmra.mrb[0].mxu0 %v129
    %v209 = vpop.f32.mrb[0].mxu0
    %v210 = vadd.f32 %v126, %v209
    %v211 = vpop.f32.mrb[0].mxu0
    %v212 = vadd.f32 %v126, %v211
    %213 = vdwg.mxu0
    %214 = vmatprep.subr.mxu0 %v141
    %215 = vmatpush1.msra.mxu0 %v138
    %216 = vmatprep.subr.mxu0 0.0
    %217 = vmatpush1.msra.mxu0 0.0
    %218 = vmatprep.subr.mxu0 0.0
    %219 = vmatpush1.msra.mxu0 0.0
    %220 = vmatprep.subr.mxu0 0.0
    %221 = vmatpush1.msra.mxu0 0.0
    %222 = vmatprep.subr.mxu0 0.0
    %223 = vmatpush1.msra.mxu0 0.0
    %224 = vmatprep.subr.mxu0 0.0
    %225 = vmatpush1.msra.mxu0 0.0
    %226 = vmatprep.subr.mxu0 0.0
    %227 = vmatpush1.msra.mxu0 0.0
    %228 = vmatprep.subr.mxu0 0.0
    %229 = vmatpush1.msra.mxu0 0.0
    %230 = vmatprep.subr.mxu0 0.0
    %231 = vmatpush1.msra.mxu0 0.0
    %232 = vmatprep.subr.mxu0 0.0
    %233 = vmatpush1.msra.mxu0 0.0
    %234 = vmatprep.subr.mxu0 0.0
    %235 = vmatpush1.msra.mxu0 0.0
    %236 = vmatprep.subr.mxu0 0.0
    %237 = vmatpush1.msra.mxu0 0.0
    %238 = vmatprep.subr.mxu0 0.0
    %239 = vmatpush1.msra.mxu0 0.0
    %240 = vmatprep.subr.mxu0 0.0
    %241 = vmatpush1.msra.mxu0 0.0
    %242 = vmatprep.subr.mxu0 0.0
    %243 = vmatpush1.msra.mxu0 0.0
    %244 = vmatprep.subr.mxu0 0.0
    %245 = vmatpush1.msra.mxu0 0.0
    %246 = vmatprep.subr.mxu0 0.0
    %247 = vmatpush1.msra.mxu0 0.0
    %248 = vmatprep.subr.mxu0 0.0
    %249 = vmatpush1.msra.mxu0 0.0
    %250 = vmatprep.subr.mxu0 0.0
    %251 = vmatpush1.msra.mxu0 0.0
    %252 = vmatprep.subr.mxu0 0.0
    %253 = vmatpush1.msra.mxu0 0.0
    %254 = vmatprep.subr.mxu0 0.0
    %255 = vmatpush1.msra.mxu0 0.0
    %256 = vmatprep.subr.mxu0 0.0
    %257 = vmatpush1.msra.mxu0 0.0
    %258 = vmatprep.subr.mxu0 0.0
    %259 = vmatpush1.msra.mxu0 0.0
    %260 = vmatprep.subr.mxu0 0.0
    %261 = vmatpush1.msra.mxu0 0.0
    %262 = vmatprep.subr.mxu0 0.0
    %263 = vmatpush1.msra.mxu0 0.0
    %264 = vmatprep.subr.mxu0 0.0
    %265 = vmatpush1.msra.mxu0 0.0
    %266 = vmatprep.subr.mxu0 0.0
    %267 = vmatpush1.msra.mxu0 0.0
    %268 = vmatprep.subr.mxu0 0.0
    %269 = vmatpush1.msra.mxu0 0.0
    %270 = vmatprep.subr.mxu0 0.0
    %271 = vmatpush1.msra.mxu0 0.0
    %272 = vmatprep.subr.mxu0 0.0
    %273 = vmatpush1.msra.mxu0 0.0
    %274 = vmatprep.subr.mxu0 0.0
    %275 = vmatpush1.msra.mxu0 0.0
    %276 = vmatprep.subr.mxu0 0.0
    %277 = vmatpush1.msra.mxu0 0.0
    %278 = vmatprep.mubr.f32.mxu0 0.0
    %279 = vmatmul.mubr.f32.gmra.mrb[0].mxu0 %v129
    %v280 = vpop.f32.mrb[0].mxu0
    %v281 = vadd.f32 %v126, %v280
    %v282 = vpop.f32.mrb[0].mxu0
    %v283 = vadd.f32 %v126, %v282
    %284 = vdwg.mxu0
    %285 = vst [vmem:[#allocation7] sm:$0xff] %v210
    %286 = vst [vmem:[#allocation7 + $0x8] sm:$0xff] %v212
    %s287 = scalar_lea.vmem [#allocation7], 16
    %288 = vst [vmem:[%s287] sm:$0xff] %v281
    %289 = vst [vmem:[%s287 + $0x8] sm:$0xff] %v283
    // Predicated region
    $region18: #{tpu_custom_call.1} parent=1 // pred_check
      _
    $region19: #{tpu_custom_call.1} parent=1 // pred_check_branch
      %291 = sbr.rel (0) target = $region21
    $region20: #{tpu_custom_call.1} parent=1 // pred_region
      %s293 = ssub.s32 512, 512
      %294 = vsyncadd [#allocation4], %s293
      %s295 = sshll.u32 [#allocation7], 4
      %s296 = int_to_ptr.vmem [resolvable:$true] %s295
      %301 = dma.vmem_to_hbm [thread:$0]  %s296, 512, %s2, [#allocation4], 256, 256, 16
    $region21: #{tpu_custom_call.1} parent=1 // pred_fallthru
      _
    // Predicated region
    $region22: #{tpu_custom_call.1} parent=1 // pred_check
      _
    $region23: #{tpu_custom_call.1} parent=1 // pred_check_branch
      %303 = sbr.rel (0) target = $region25
    $region24: #{tpu_custom_call.1} parent=1 // pred_region
      %304 = dma.done [#allocation4], 512
    $region25: #{tpu_custom_call.1} parent=1 // pred_fallthru
      _
    %305 = vsyncpa [#allocation3], 1
    %306 = vsyncpa [#allocation6], 1
    %307 = vsyncpa [#allocation4], 1

</llo_original>
